<compile_context>
chip_gen: v6e
topology: v6e:2x2x1
jax: 0.10.0
libtpu: 0.0.40
codegen_flags: <defaults>
</compile_context>

<pallas_src>
import jax
import jax.numpy as jnp
from jax.experimental import pallas as pl
from jax.experimental.pallas import tpu as pltpu


def _round_up(n, m):
    return ((n + m - 1) // m) * m


def mlp_kernel(x_ref, w1_ref, b1_ref, w2_ref, b2_ref, o_ref):
    # x_ref: (TB, D_in_pad), w1_ref: (D_in_pad, H_pad), b1_ref: (1, H_pad)
    # w2_ref: (H_pad, O_pad), b2_ref: (1, O_pad), o_ref: (TB, O_pad)
    x = x_ref[...].astype(w1_ref.dtype)                       # no-op if x already in param dtype
    h = jnp.dot(x, w1_ref[...], preferred_element_type=jnp.float32) + b1_ref[...]
    h = jnp.maximum(h, 0.0)                                    # ReLU in f32 (VPU)
    h = h.astype(w2_ref.dtype)                                 # bf16 operand for 2nd MXU pass if requested
    y = jnp.dot(h, w2_ref[...], preferred_element_type=jnp.float32) + b2_ref[...]
    o_ref[...] = jnp.maximum(y, 0.0).astype(o_ref.dtype)       # final ReLU (as in the module), lane-dense store


def prepare_params(w1, b1, w2, b2, *, lane=128, param_dtype=jnp.float32):
    """One-time layout prep (hoisted out of the per-call hot path).

    w1: (hidden, input)  b1: (hidden,)   -- PyTorch nn.Linear layout
    w2: (output, hidden) b2: (output,)
    Weights are transposed to (in, out); input/hidden/output dims are zero-padded to
    the 128-lane width and optionally cast to `param_dtype` (e.g. bf16).
    Zero padding is exact: padded input columns hit zero weight rows, padded hidden
    units stay 0 through ReLU, padded output lanes are bias-0 -> ReLU(0) = 0.
    """
    hid, d_in = w1.shape
    d_out = w2.shape[0]
    d_in_p = _round_up(d_in, lane)
    hid_p = _round_up(hid, lane)
    out_p = _round_up(d_out, lane)

    w1_t = jnp.zeros((d_in_p, hid_p), param_dtype).at[:d_in, :hid].set(w1.T.astype(param_dtype))
    b1_p = jnp.zeros((1, hid_p), param_dtype).at[:, :hid].set(b1.astype(param_dtype))
    w2_t = jnp.zeros((hid_p, out_p), param_dtype).at[:hid, :d_out].set(w2.T.astype(param_dtype))
    b2_p = jnp.zeros((1, out_p), param_dtype).at[:, :d_out].set(b2.astype(param_dtype))
    return {"w1_t": w1_t, "b1": b1_p, "w2_t": w2_t, "b2": b2_p,
            "d_in": d_in, "d_out": d_out}


def _choose_batch_tile(B, max_tile, min_steps):
    """Pick a batch tile that gives ~min_steps grid steps (DMA/compute overlap and
    v7x megacore sharding), is a multiple of 8 (sublane constraint for TB != B),
    and is capped at max_tile. Tiny batches fall back to one full-array block."""
    if B <= 8 * min_steps:
        return B                                              # block == full dim: always legal
    tb = _round_up(pl.cdiv(B, min_steps), 8)
    return max(8, min(tb, max_tile))


def fashion_mnist_model_v1(x_nchw, params, *, batch_tile=2048, min_grid_steps=4,
                           out_dtype=jnp.float32, return_padded=False):
    """Forward pass matching the PyTorch module.

    x_nchw: (B, C, H, W) in f32 or bf16 (bf16 inputs are used as-is — feed bf16 from
            the data pipeline rather than casting here).
    params: output of prepare_params().
    out_dtype: dtype of the stored logits (bf16 halves writeback; accumulation is f32).
    return_padded: if True, return the (B, 128)-lane padded logits (recommended for
            perf — lets the consumer mask lanes >= d_out instead of paying an extra
            XLA slice pass). If False, return (B, d_out) like the PyTorch module.
    """
    B = x_nchw.shape[0]
    x_flat = x_nchw.reshape(B, -1)                            # nn.Flatten()

    w1_t, b1_p, w2_t, b2_p = params["w1_t"], params["b1"], params["w2_t"], params["b2"]
    d_in_p = w1_t.shape[0]
    hid_p = w1_t.shape[1]
    out_p = w2_t.shape[1]

    if x_flat.shape[1] != d_in_p:
        # Feature dim not 128-aligned (e.g. real FashionMNIST 784 -> 896). Prefer to pad
        # upstream in the data pipeline; done here only as a correctness fallback.
        assert x_flat.shape[1] == params["d_in"], "x feature dim does not match params"
        x_flat = jnp.pad(x_flat, ((0, 0), (0, d_in_p - x_flat.shape[1])))

    TB = _choose_batch_tile(B, batch_tile, min_grid_steps)
    grid = (pl.cdiv(B, TB),)

    out_padded = pl.pallas_call(
        mlp_kernel,
        out_shape=jax.ShapeDtypeStruct((B, out_p), out_dtype),
        grid=grid,
        in_specs=[
            pl.BlockSpec((TB, d_in_p), lambda i: (i, 0)),      # x: streamed per batch tile
            pl.BlockSpec((d_in_p, hid_p), lambda i: (0, 0)),   # w1: VMEM-resident
            pl.BlockSpec((1, hid_p), lambda i: (0, 0)),        # b1: VMEM-resident
            pl.BlockSpec((hid_p, out_p), lambda i: (0, 0)),    # w2: VMEM-resident
            pl.BlockSpec((1, out_p), lambda i: (0, 0)),        # b2: VMEM-resident
        ],
        out_specs=pl.BlockSpec((TB, out_p), lambda i: (i, 0)),
        compiler_params=pltpu.CompilerParams(
            dimension_semantics=("parallel",)),                # batch axis megacore-shardable
    )(x_flat, w1_t, b1_p, w2_t, b2_p)

    if return_padded:
        return out_padded                                      # consumer masks lanes >= d_out
    return out_padded[:, :params["d_out"]]                     # module-exact (B, d_out) output


def init_linear_params(key, in_features, out_features):
    """Deterministic init mimicking PyTorch nn.Linear default (uniform +/- 1/sqrt(fan_in))."""
    kw, kb = jax.random.split(key)
    bound = 1.0 / jnp.sqrt(in_features)
    w = jax.random.uniform(kw, (out_features, in_features), jnp.float32, -bound, bound)
    b = jax.random.uniform(kb, (out_features,), jnp.float32, -bound, bound)
    return w, b


def _reference(x, w1, b1, w2, b2):
    B = x.shape[0]
    h = jnp.maximum(x.reshape(B, -1).astype(jnp.float32) @ w1.T + b1, 0.0)
    return jnp.maximum(h @ w2.T + b2, 0.0)


if __name__ == "__main__":
    # Small shapes consistent with the module's forward:
    # batch=2, single channel 16x16 image -> input_shape=256, hidden_units=32, output_shape=10
    B, C, H, W = 2, 1, 16, 16
    input_shape = C * H * W
    hidden_units = 32
    output_shape = 10

    key = jax.random.PRNGKey(0)
    kx, k1, k2 = jax.random.split(key, 3)

    x = jax.random.normal(kx, (B, C, H, W), jnp.float32)
    w1, b1 = init_linear_params(k1, input_shape, hidden_units)
    w2, b2 = init_linear_params(k2, hidden_units, output_shape)

    ref = _reference(x, w1, b1, w2, b2)

    # 1) Module-exact path: f32 params, f32 output, sliced to (B, 10). Tight tolerance.
    params_f32 = prepare_params(w1, b1, w2, b2, param_dtype=jnp.float32)
    out = jax.block_until_ready(fashion_mnist_model_v1(x, params_f32))
    assert out.shape == (B, output_shape)
    assert jnp.allclose(out, ref, atol=1e-5, rtol=1e-5)

    # 2) Perf path: bf16 params + bf16 activations + bf16 padded output, no wrapper slice.
    params_bf16 = prepare_params(w1, b1, w2, b2, param_dtype=jnp.bfloat16)
    out_pad = jax.block_until_ready(
        fashion_mnist_model_v1(x.astype(jnp.bfloat16), params_bf16,
                               out_dtype=jnp.bfloat16, return_padded=True))
    assert out_pad.shape == (B, 128)
    assert out_pad.dtype == jnp.bfloat16
    assert jnp.allclose(out_pad[:, :output_shape].astype(jnp.float32), ref, atol=1e-1, rtol=1e-1)
    assert jnp.all(out_pad[:, output_shape:] == 0)             # padded lanes exactly zero

    # 3) Batch-tiled path with ragged masked tail: B=40 -> TB=16, 3 grid steps.
    xb = jax.random.normal(jax.random.PRNGKey(1), (40, C, H, W), jnp.float32)
    out_tiled = jax.block_until_ready(fashion_mnist_model_v1(xb, params_f32))
    assert jnp.allclose(out_tiled, _reference(xb, w1, b1, w2, b2), atol=1e-5, rtol=1e-5)

    # 4) Larger batch exercising the grid-shaping heuristic: B=256 -> TB=64, 4 grid steps,
    #    padded output returned (no slice pass).
    xc = jax.random.normal(jax.random.PRNGKey(2), (256, C, H, W), jnp.float32)
    out_big = jax.block_until_ready(
        fashion_mnist_model_v1(xc, params_f32, return_padded=True))
    assert out_big.shape == (256, 128)
    assert jnp.allclose(out_big[:, :output_shape], _reference(xc, w1, b1, w2, b2),
                        atol=1e-5, rtol=1e-5)

    print("KERNEL_OK")
</pallas_src>

<mosaic_0001>
module attributes {stable_mosaic.version = 11 : i64} {
  func.func @mlp_kernel(%arg0: i32, %arg1: memref<2x256xf32, #tpu.memory_space<vmem>>, %arg2: memref<256x128xf32, #tpu.memory_space<vmem>>, %arg3: memref<1x128xf32, #tpu.memory_space<vmem>>, %arg4: memref<128x128xf32, #tpu.memory_space<vmem>>, %arg5: memref<1x128xf32, #tpu.memory_space<vmem>>, %arg6: memref<2x128xf32, #tpu.memory_space<vmem>>) attributes {dimension_semantics = [#tpu.dimension_semantics<parallel>], iteration_bounds = array<i64: 1>, scalar_prefetch = 0 : i64, scratch_operands = 0 : i64, tpu.core_type = #tpu.core_type<tc>, window_params = [{transform_indices = @transform_0, window_bounds = array<i64: 2, 256>}, {pipeline_mode = #tpu.pipeline_mode<synchronous>, transform_indices = @transform_1, window_bounds = array<i64: 256, 128>}, {pipeline_mode = #tpu.pipeline_mode<synchronous>, transform_indices = @transform_2, window_bounds = array<i64: 1, 128>}, {pipeline_mode = #tpu.pipeline_mode<synchronous>, transform_indices = @transform_3, window_bounds = array<i64: 128, 128>}, {pipeline_mode = #tpu.pipeline_mode<synchronous>, transform_indices = @transform_4, window_bounds = array<i64: 1, 128>}, {transform_indices = @transform_5, window_bounds = array<i64: 2, 128>}]} {
    %c0 = arith.constant 0 : index
    %c0_0 = arith.constant 0 : index
    %0 = vector.load %arg1[%c0, %c0_0] : memref<2x256xf32, #tpu.memory_space<vmem>>, vector<2x256xf32>
    %c0_1 = arith.constant 0 : index
    %c0_2 = arith.constant 0 : index
    %1 = vector.load %arg2[%c0_1, %c0_2] : memref<256x128xf32, #tpu.memory_space<vmem>>, vector<256x128xf32>
    %cst = arith.constant dense<0.000000e+00> : vector<2x128xf32>
    %2 = tpu.matmul %0, %1, %cst {dimension_numbers = #tpu.dot_dimension_numbers<[1], [0], [0], [1], [0, 0, 1, 1], [], []>} : vector<2x256xf32>, vector<256x128xf32>, vector<2x128xf32> -> vector<2x128xf32>
    %c0_3 = arith.constant 0 : index
    %c0_4 = arith.constant 0 : index
    %3 = vector.load %arg3[%c0_3, %c0_4] : memref<1x128xf32, #tpu.memory_space<vmem>>, vector<1x128xf32>
    %4 = vector.broadcast %3 : vector<1x128xf32> to vector<2x128xf32>
    %5 = arith.addf %2, %4 : vector<2x128xf32>
    %cst_5 = arith.constant 0.000000e+00 : f32
    %6 = vector.broadcast %cst_5 : f32 to vector<2x128xf32>
    %7 = arith.maximumf %5, %6 : vector<2x128xf32>
    %c0_6 = arith.constant 0 : index
    %c0_7 = arith.constant 0 : index
    %8 = vector.load %arg4[%c0_6, %c0_7] : memref<128x128xf32, #tpu.memory_space<vmem>>, vector<128x128xf32>
    %cst_8 = arith.constant dense<0.000000e+00> : vector<2x128xf32>
    %9 = tpu.matmul %7, %8, %cst_8 {dimension_numbers = #tpu.dot_dimension_numbers<[1], [0], [0], [1], [0, 0, 1, 1], [], []>} : vector<2x128xf32>, vector<128x128xf32>, vector<2x128xf32> -> vector<2x128xf32>
    %c0_9 = arith.constant 0 : index
    %c0_10 = arith.constant 0 : index
    %10 = vector.load %arg5[%c0_9, %c0_10] : memref<1x128xf32, #tpu.memory_space<vmem>>, vector<1x128xf32>
    %11 = vector.broadcast %10 : vector<1x128xf32> to vector<2x128xf32>
    %12 = arith.addf %9, %11 : vector<2x128xf32>
    %cst_11 = arith.constant 0.000000e+00 : f32
    %13 = vector.broadcast %cst_11 : f32 to vector<2x128xf32>
    %14 = arith.maximumf %12, %13 : vector<2x128xf32>
    %c0_12 = arith.constant 0 : index
    %c0_13 = arith.constant 0 : index
    %15 = vector.load %arg6[%c0_12, %c0_13] : memref<2x128xf32, #tpu.memory_space<vmem>>, vector<2x128xf32>
    tpu.vector_store %arg6[%c0_12, %c0_13], %14 {strides = array<i32>} : memref<2x128xf32, #tpu.memory_space<vmem>>, vector<2x128xf32>,
    return
  }
  func.func @transform_0(%arg0: i32) -> (i32, i32) {
    %c0_i32 = arith.constant 0 : i32
    %c0_i32_0 = arith.constant 0 : i32
    return %arg0, %c0_i32 : i32, i32
  }
  func.func @transform_1(%arg0: i32) -> (i32, i32) {
    %c0_i32 = arith.constant 0 : i32
    %c0_i32_0 = arith.constant 0 : i32
    %c0_i32_1 = arith.constant 0 : i32
    return %c0_i32, %c0_i32_0 : i32, i32
  }
  func.func @transform_2(%arg0: i32) -> (i32, i32) {
    %c0_i32 = arith.constant 0 : i32
    %c0_i32_0 = arith.constant 0 : i32
    %c0_i32_1 = arith.constant 0 : i32
    return %c0_i32, %c0_i32_0 : i32, i32
  }
  func.func @transform_3(%arg0: i32) -> (i32, i32) {
    %c0_i32 = arith.constant 0 : i32
    %c0_i32_0 = arith.constant 0 : i32
    %c0_i32_1 = arith.constant 0 : i32
    return %c0_i32, %c0_i32_0 : i32, i32
  }
  func.func @transform_4(%arg0: i32) -> (i32, i32) {
    %c0_i32 = arith.constant 0 : i32
    %c0_i32_0 = arith.constant 0 : i32
    %c0_i32_1 = arith.constant 0 : i32
    return %c0_i32, %c0_i32_0 : i32, i32
  }
  func.func @transform_5(%arg0: i32) -> (i32, i32) {
    %c0_i32 = arith.constant 0 : i32
    %c0_i32_0 = arith.constant 0 : i32
    return %arg0, %c0_i32 : i32, i32
  }
}

</mosaic_0001>

<llo_original>
// kernel: tpu_custom_call.1
$region0: #{tpu_custom_call.1}
  #allocation0 [shape = 'u32[]', space=smem, size = 0x4, offset = 0x4, fixed_abs, tag = 'smem constant byte address 0x4 - core index']
  #allocation1 [shape = 'u32[144,128]{1,0:T(1,128)}', space=vmem, size = 0x12000, scoped, tag = 'internal scratch']
  %s0 = inlined_call_operand.hbm [shape: f32[2,256], index: 0, kind: input, shape index: {}]
  %s1 = inlined_call_operand.hbm [shape: f32[256,128], index: 1, kind: input, shape index: {}]
  %s2 = inlined_call_operand.vmem [shape: f32[1,128], index: 2, kind: input, shape index: {}]
  %s3 = inlined_call_operand.hbm [shape: f32[128,128], index: 3, kind: input, shape index: {}]
  %s4 = inlined_call_operand.vmem [shape: f32[1,128], index: 4, kind: input, shape index: {}]
  %s5 = inlined_call_operand.hbm [shape: f32[2,128], index: 5, kind: output, shape index: {}]
  %s6 = sld [smem:[#allocation0]]
  $region42: #{tpu_custom_call.1} parent=0
    _
  %s8 = ssub.s32 1, %s6
  %s9 = scalar_select 0, %s8, %s6
  $region1: #{tpu_custom_call.1} parent=0
    #allocation2 [shape = 'u8[2048]{0}', space=vmem, size = 0x800, scoped, tag = 'input window, operand 0, single buffered']
    #allocation3 [shape = 's32[1]{0}', space=sflag, size = 0x4, scoped, tag = 'scoped memory for tpu_custom_call.1']
    #allocation4 [shape = 's32[1]{0}', space=sflag, size = 0x4, scoped, tag = 'scoped memory for tpu_custom_call.1']
    #allocation5 [shape = 'u8[131072]{0}', space=vmem, size = 0x20000, scoped, tag = 'input window, operand 1, single buffered']
    #allocation6 [shape = 's32[1]{0}', space=sflag, size = 0x4, scoped, tag = 'scoped memory for tpu_custom_call.1']
    #allocation7 [shape = 'u8[65536]{0}', space=vmem, size = 0x10000, scoped, tag = 'input window, operand 3, single buffered']
    #allocation8 [shape = 'u8[1024]{0}', space=vmem, size = 0x400, scoped, tag = 'output window, operand 0, single buffered']
    %10 = vsyncpa [#allocation3], 0
    %11 = vsyncpa [#allocation6], 0
    %12 = vsyncpa [#allocation4], 0
    // Predicated region
    $region2: #{tpu_custom_call.1} parent=1 // pred_check
      _
    $region3: #{tpu_custom_call.1} parent=1 // pred_check_branch
      %14 = sbr.rel (0) target = $region5
    $region4: #{tpu_custom_call.1} parent=1 // pred_region
      %s16 = ssub.s32 64, 64
      %17 = vsyncadd [#allocation3], %s16
      %s19 = sshll.u32 [#allocation2], 4
      %s20 = int_to_ptr.vmem [resolvable:$true] %s19
      %22 = dma.hbm_to_vmem [thread:$0]  %s0, 64, %s20, [#allocation3]
    $region5: #{tpu_custom_call.1} parent=1 // pred_fallthru
      _
    // Predicated region
    $region6: #{tpu_custom_call.1} parent=1 // pred_check
      _
    $region7: #{tpu_custom_call.1} parent=1 // pred_check_branch
      %24 = sbr.rel (0) target = $region9
    $region8: #{tpu_custom_call.1} parent=1 // pred_region
      %s26 = ssub.s32 4096, 4096
      %27 = vsyncadd [#allocation6], %s26
      %s28 = sshll.u32 [#allocation5], 4
      %s29 = int_to_ptr.vmem [resolvable:$true] %s28
      %34 = dma.hbm_to_vmem [thread:$0]  %s1, 4096, %s29, [#allocation6], 128, 128, 8
    $region9: #{tpu_custom_call.1} parent=1 // pred_fallthru
      _
    // Predicated region
    $region10: #{tpu_custom_call.1} parent=1 // pred_check
      _
    $region11: #{tpu_custom_call.1} parent=1 // pred_check_branch
      %36 = sbr.rel (0) target = $region13
    $region12: #{tpu_custom_call.1} parent=1 // pred_region
      _
    $region13: #{tpu_custom_call.1} parent=1 // pred_fallthru
      _
    // Predicated region
    $region14: #{tpu_custom_call.1} parent=1 // pred_check
      _
    $region15: #{tpu_custom_call.1} parent=1 // pred_check_branch
      %38 = sbr.rel (0) target = $region17
    $region16: #{tpu_custom_call.1} parent=1 // pred_region
      %s40 = ssub.s32 2048, 2048
      %41 = vsyncadd [#allocation6], %s40
      %s42 = sshll.u32 [#allocation7], 4
      %s43 = int_to_ptr.vmem [resolvable:$true] %s42
      %48 = dma.hbm_to_vmem [thread:$0]  %s3, 2048, %s43, [#allocation6], 128, 128, 8
    $region17: #{tpu_custom_call.1} parent=1 // pred_fallthru
      _
    // Predicated region
    $region18: #{tpu_custom_call.1} parent=1 // pred_check
      _
    $region19: #{tpu_custom_call.1} parent=1 // pred_check_branch
      %50 = sbr.rel (0) target = $region21
    $region20: #{tpu_custom_call.1} parent=1 // pred_region
      _
    $region21: #{tpu_custom_call.1} parent=1 // pred_fallthru
      _
    // Predicated region
    $region22: #{tpu_custom_call.1} parent=1 // pred_check
      _
    $region23: #{tpu_custom_call.1} parent=1 // pred_check_branch
      %52 = sbr.rel (0) target = $region25
    $region24: #{tpu_custom_call.1} parent=1 // pred_region
      %53 = dma.done [#allocation3], 64
    $region25: #{tpu_custom_call.1} parent=1 // pred_fallthru
      _
    // Predicated region
    $region26: #{tpu_custom_call.1} parent=1 // pred_check
      _
    $region27: #{tpu_custom_call.1} parent=1 // pred_check_branch
      %55 = sbr.rel (0) target = $region29
    $region28: #{tpu_custom_call.1} parent=1 // pred_region
      %56 = dma.done [#allocation6], 4096
    $region29: #{tpu_custom_call.1} parent=1 // pred_fallthru
      _
    // Predicated region
    $region30: #{tpu_custom_call.1} parent=1 // pred_check
      _
    $region31: #{tpu_custom_call.1} parent=1 // pred_check_branch
      %58 = sbr.rel (0) target = $region33
    $region32: #{tpu_custom_call.1} parent=1 // pred_region
      %59 = dma.done [#allocation6], 2048
    $region33: #{tpu_custom_call.1} parent=1 // pred_fallthru
      _
    %v60 = vld [vmem:[#allocation2] sm:$0xf]
    %v61 = vld [vmem:[#allocation5] sm:$0xff]
    %v62 = vld [vmem:[#allocation5 + $0x8] sm:$0xff]
    %v63 = vld [vmem:[#allocation5 + $0x10] sm:$0xff]
    %v64 = vld [vmem:[#allocation5 + $0x18] sm:$0xff]
    %v65 = vld [vmem:[#allocation5 + $0x20] sm:$0xff]
    %v66 = vld [vmem:[#allocation5 + $0x28] sm:$0xff]
    %v67 = vld [vmem:[#allocation5 + $0x30] sm:$0xff]
    %v68 = vld [vmem:[#allocation5 + $0x38] sm:$0xff]
    %v69 = vld [vmem:[#allocation5 + $0x40] sm:$0xff]
    %v70 = vld [vmem:[#allocation5 + $0x48] sm:$0xff]
    %v71 = vld [vmem:[#allocation5 + $0x50] sm:$0xff]
    %v72 = vld [vmem:[#allocation5 + $0x58] sm:$0xff]
    %v73 = vld [vmem:[#allocation5 + $0x60] sm:$0xff]
    %v74 = vld [vmem:[#allocation5 + $0x68] sm:$0xff]
    %v75 = vld [vmem:[#allocation5 + $0x70] sm:$0xff]
    %v76 = vld [vmem:[#allocation5 + $0x78] sm:$0xff]
    %v77 = vld [vmem:[#allocation5 + $0x80] sm:$0xff]
    %v78 = vld [vmem:[#allocation5 + $0x88] sm:$0xff]
    %v79 = vld [vmem:[#allocation5 + $0x90] sm:$0xff]
    %v80 = vld [vmem:[#allocation5 + $0x98] sm:$0xff]
    %v81 = vld [vmem:[#allocation5 + $0xa0] sm:$0xff]
    %v82 = vld [vmem:[#allocation5 + $0xa8] sm:$0xff]
    %v83 = vld [vmem:[#allocation5 + $0xb0] sm:$0xff]
    %v84 = vld [vmem:[#allocation5 + $0xb8] sm:$0xff]
    %v85 = vld [vmem:[#allocation5 + $0xc0] sm:$0xff]
    %v86 = vld [vmem:[#allocation5 + $0xc8] sm:$0xff]
    %v87 = vld [vmem:[#allocation5 + $0xd0] sm:$0xff]
    %v88 = vld [vmem:[#allocation5 + $0xd8] sm:$0xff]
    %v89 = vld [vmem:[#allocation5 + $0xe0] sm:$0xff]
    %v90 = vld [vmem:[#allocation5 + $0xe8] sm:$0xff]
    %v91 = vld [vmem:[#allocation5 + $0xf0] sm:$0xff]
    %v92 = vld [vmem:[#allocation5 + $0xf8] sm:$0xff]
    %v93 = vld [vmem:[%s2] sm:$0x1]
    %v95 = vlaneseq
    %v96 = vshrl.u32 %v95, 7
    %v97 = vsub.s32 0, %v96
    %v98 = vrot.slane %v93, %v97
    %v102 = vunpack.c.l.s4 1983009808
    %v103 = vunpack.c.0.s8 %v102
    %v104 = vlaneseq
    %v105 = vshrl.u32 %v104, 7
    %v106 = vsub.s32 %v103, %v105
    %v107 = vrot.slane %v60, %v106
    %v108 = vcombine.high %v107, %v107
    %111 = vmatprep.subr.mxu0 0.0
    %112 = vmatpush1.msra.mxu0 %v76
    %113 = vmatprep.subr.mxu0 0.0
    %114 = vmatpush1.msra.mxu0 %v75
    %115 = vmatprep.subr.mxu0 0.0
    %116 = vmatpush1.msra.mxu0 %v74
    %117 = vmatprep.subr.mxu0 0.0
    %118 = vmatpush1.msra.mxu0 %v73
    %119 = vmatprep.subr.mxu0 0.0
    %120 = vmatpush1.msra.mxu0 %v72
    %121 = vmatprep.subr.mxu0 0.0
    %122 = vmatpush1.msra.mxu0 %v71
    %123 = vmatprep.subr.mxu0 0.0
    %124 = vmatpush1.msra.mxu0 %v70
    %125 = vmatprep.subr.mxu0 0.0
    %126 = vmatpush1.msra.mxu0 %v69
    %127 = vmatprep.subr.mxu0 0.0
    %128 = vmatpush1.msra.mxu0 %v68
    %129 = vmatprep.subr.mxu0 0.0
    %130 = vmatpush1.msra.mxu0 %v67
    %131 = vmatprep.subr.mxu0 0.0
    %132 = vmatpush1.msra.mxu0 %v66
    %133 = vmatprep.subr.mxu0 0.0
    %134 = vmatpush1.msra.mxu0 %v65
    %135 = vmatprep.subr.mxu0 0.0
    %136 = vmatpush1.msra.mxu0 %v64
    %137 = vmatprep.subr.mxu0 0.0
    %138 = vmatpush1.msra.mxu0 %v63
    %139 = vmatprep.subr.mxu0 0.0
    %140 = vmatpush1.msra.mxu0 %v62
    %141 = vmatprep.subr.mxu0 0.0
    %142 = vmatpush1.msra.mxu0 %v61
    %143 = vmatprep.subr.mxu0 0.0
    %144 = vmatpush2.msra.mxu0 %v92
    %145 = vmatprep.subr.mxu0 0.0
    %146 = vmatpush2.msra.mxu0 %v91
    %147 = vmatprep.subr.mxu0 0.0
    %148 = vmatpush2.msra.mxu0 %v90
    %149 = vmatprep.subr.mxu0 0.0
    %150 = vmatpush2.msra.mxu0 %v89
    %151 = vmatprep.subr.mxu0 0.0
    %152 = vmatpush2.msra.mxu0 %v88
    %153 = vmatprep.subr.mxu0 0.0
    %154 = vmatpush2.msra.mxu0 %v87
    %155 = vmatprep.subr.mxu0 0.0
    %156 = vmatpush2.msra.mxu0 %v86
    %157 = vmatprep.subr.mxu0 0.0
    %158 = vmatpush2.msra.mxu0 %v85
    %159 = vmatprep.subr.mxu0 0.0
    %160 = vmatpush2.msra.mxu0 %v84
    %161 = vmatprep.subr.mxu0 0.0
    %162 = vmatpush2.msra.mxu0 %v83
    %163 = vmatprep.subr.mxu0 0.0
    %164 = vmatpush2.msra.mxu0 %v82
    %165 = vmatprep.subr.mxu0 0.0
    %166 = vmatpush2.msra.mxu0 %v81
    %167 = vmatprep.subr.mxu0 0.0
    %168 = vmatpush2.msra.mxu0 %v80
    %169 = vmatprep.subr.mxu0 0.0
    %170 = vmatpush2.msra.mxu0 %v79
    %171 = vmatprep.subr.mxu0 0.0
    %172 = vmatpush2.msra.mxu0 %v78
    %173 = vmatprep.subr.mxu0 0.0
    %174 = vmatpush2.msra.mxu0 %v77
    %175 = vmatprep.mubr.f32.mxu0 %v108
    %176 = vmatmul.mubr.f32.gmra.mxu0 %v107
    %v177 = vpop.f32.mrf.mxu0
    %v178 = vadd.f32 %v98, %v177
    %v179 = vpop.f32.mrf.mxu0
    %180 = vdwg.mxu0
    %v181 = vmax.f32 %v178, 0.0
    %v182 = vld [vmem:[#allocation7] sm:$0xff]
    %v183 = vld [vmem:[#allocation7 + $0x8] sm:$0xff]
    %v184 = vld [vmem:[#allocation7 + $0x10] sm:$0xff]
    %v185 = vld [vmem:[#allocation7 + $0x18] sm:$0xff]
    %v186 = vld [vmem:[#allocation7 + $0x20] sm:$0xff]
    %v187 = vld [vmem:[#allocation7 + $0x28] sm:$0xff]
    %v188 = vld [vmem:[#allocation7 + $0x30] sm:$0xff]
    %v189 = vld [vmem:[#allocation7 + $0x38] sm:$0xff]
    %v190 = vld [vmem:[#allocation7 + $0x40] sm:$0xff]
    %v191 = vld [vmem:[#allocation7 + $0x48] sm:$0xff]
    %v192 = vld [vmem:[#allocation7 + $0x50] sm:$0xff]
    %v193 = vld [vmem:[#allocation7 + $0x58] sm:$0xff]
    %v194 = vld [vmem:[#allocation7 + $0x60] sm:$0xff]
    %v195 = vld [vmem:[#allocation7 + $0x68] sm:$0xff]
    %v196 = vld [vmem:[#allocation7 + $0x70] sm:$0xff]
    %v197 = vld [vmem:[#allocation7 + $0x78] sm:$0xff]
    %v198 = vld [vmem:[%s4] sm:$0x1]
    %v200 = vlaneseq
    %v201 = vshrl.u32 %v200, 7
    %v202 = vsub.s32 0, %v201
    %v203 = vrot.slane %v198, %v202
    %205 = vmatprep.subr.mxu0 0.0
    %206 = vmatpush1.msra.mxu0 %v197
    %207 = vmatprep.subr.mxu0 0.0
    %208 = vmatpush1.msra.mxu0 %v196
    %209 = vmatprep.subr.mxu0 0.0
    %210 = vmatpush1.msra.mxu0 %v195
    %211 = vmatprep.subr.mxu0 0.0
    %212 = vmatpush1.msra.mxu0 %v194
    %213 = vmatprep.subr.mxu0 0.0
    %214 = vmatpush1.msra.mxu0 %v193
    %215 = vmatprep.subr.mxu0 0.0
    %216 = vmatpush1.msra.mxu0 %v192
    %217 = vmatprep.subr.mxu0 0.0
    %218 = vmatpush1.msra.mxu0 %v191
    %219 = vmatprep.subr.mxu0 0.0
    %220 = vmatpush1.msra.mxu0 %v190
    %221 = vmatprep.subr.mxu0 0.0
    %222 = vmatpush1.msra.mxu0 %v189
    %223 = vmatprep.subr.mxu0 0.0
    %224 = vmatpush1.msra.mxu0 %v188
    %225 = vmatprep.subr.mxu0 0.0
    %226 = vmatpush1.msra.mxu0 %v187
    %227 = vmatprep.subr.mxu0 0.0
    %228 = vmatpush1.msra.mxu0 %v186
    %229 = vmatprep.subr.mxu0 0.0
    %230 = vmatpush1.msra.mxu0 %v185
    %231 = vmatprep.subr.mxu0 0.0
    %232 = vmatpush1.msra.mxu0 %v184
    %233 = vmatprep.subr.mxu0 0.0
    %234 = vmatpush1.msra.mxu0 %v183
    %235 = vmatprep.subr.mxu0 0.0
    %236 = vmatpush1.msra.mxu0 %v182
    %237 = vmatprep.subr.mxu0 0.0
    %238 = vmatpush2.msra.mxu0 0.0
    %239 = vmatprep.subr.mxu0 0.0
    %240 = vmatpush2.msra.mxu0 0.0
    %241 = vmatprep.subr.mxu0 0.0
    %242 = vmatpush2.msra.mxu0 0.0
    %243 = vmatprep.subr.mxu0 0.0
    %244 = vmatpush2.msra.mxu0 0.0
    %245 = vmatprep.subr.mxu0 0.0
    %246 = vmatpush2.msra.mxu0 0.0
    %247 = vmatprep.subr.mxu0 0.0
    %248 = vmatpush2.msra.mxu0 0.0
    %249 = vmatprep.subr.mxu0 0.0
    %250 = vmatpush2.msra.mxu0 0.0
    %251 = vmatprep.subr.mxu0 0.0
    %252 = vmatpush2.msra.mxu0 0.0
    %253 = vmatprep.subr.mxu0 0.0
    %254 = vmatpush2.msra.mxu0 0.0
    %255 = vmatprep.subr.mxu0 0.0
    %256 = vmatpush2.msra.mxu0 0.0
    %257 = vmatprep.subr.mxu0 0.0
    %258 = vmatpush2.msra.mxu0 0.0
    %259 = vmatprep.subr.mxu0 0.0
    %260 = vmatpush2.msra.mxu0 0.0
    %261 = vmatprep.subr.mxu0 0.0
    %262 = vmatpush2.msra.mxu0 0.0
    %263 = vmatprep.subr.mxu0 0.0
    %264 = vmatpush2.msra.mxu0 0.0
    %265 = vmatprep.subr.mxu0 0.0
    %266 = vmatpush2.msra.mxu0 0.0
    %267 = vmatprep.subr.mxu0 0.0
    %268 = vmatpush2.msra.mxu0 0.0
    %269 = vmatprep.mubr.f32.mxu0 0.0
    %270 = vmatmul.mubr.f32.gmra.mxu0 %v181
    %v271 = vpop.f32.mrf.mxu0
    %v272 = vadd.f32 %v203, %v271
    %v273 = vpop.f32.mrf.mxu0
    %274 = vdwg.mxu0
    %v275 = vmax.f32 %v272, 0.0
    %276 = vst [vmem:[#allocation8] sm:$0x3] %v275
    // Predicated region
    $region34: #{tpu_custom_call.1} parent=1 // pred_check
      _
    $region35: #{tpu_custom_call.1} parent=1 // pred_check_branch
      %278 = sbr.rel (0) target = $region37
    $region36: #{tpu_custom_call.1} parent=1 // pred_region
      %s280 = ssub.s32 32, 32
      %281 = vsyncadd [#allocation4], %s280
      %s283 = sshll.u32 [#allocation8], 4
      %s284 = int_to_ptr.vmem [resolvable:$true] %s283
      %286 = dma.vmem_to_hbm [thread:$0]  %s284, 32, %s5, [#allocation4]
    $region37: #{tpu_custom_call.1} parent=1 // pred_fallthru
      _
    // Predicated region
    $region38: #{tpu_custom_call.1} parent=1 // pred_check
      _
    $region39: #{tpu_custom_call.1} parent=1 // pred_check_branch
      %288 = sbr.rel (0) target = $region41
    $region40: #{tpu_custom_call.1} parent=1 // pred_region
      %289 = dma.done [#allocation4], 32
    $region41: #{tpu_custom_call.1} parent=1 // pred_fallthru
      _
    %290 = vsyncpa [#allocation3], 1
    %291 = vsyncpa [#allocation6], 1
    %292 = vsyncpa [#allocation4], 1

</llo_original>
